<compile_context>
chip_gen: v7x
topology: tpu7x:2x2x1
jax: 0.10.0
libtpu: 0.0.40
codegen_flags: <defaults>
</compile_context>

<pallas_src>
import jax
import jax.numpy as jnp
from jax.experimental import pallas as pl
from jax.experimental.pallas import tpu as pltpu


def _grl_forward_kernel(t_ref, out_ref):
    # GradientReversalFunction.forward(x, lambda_) == x.clone()
    # One scalar copy on the scalar path: sld + sst, no vector regs involved.
    out_ref[0] = t_ref[0]


def _grl_pallas_identity(x):
    """Identity clone of the (1,) parameter via a minimal SMEM Pallas kernel.

    The output aliases the input buffer (input_output_aliases) so no fresh
    HBM allocation / extra round trip is introduced for a 4-byte copy.
    """
    return pl.pallas_call(
        _grl_forward_kernel,
        out_shape=jax.ShapeDtypeStruct(x.shape, x.dtype),
        in_specs=[pl.BlockSpec(memory_space=pltpu.MemorySpace.SMEM)],
        out_specs=pl.BlockSpec(memory_space=pltpu.MemorySpace.SMEM),
        input_output_aliases={0: 0},
    )(x)


@jax.custom_vjp
def gradient_reversal(x, lambda_):
    # lambda_ only matters in backward; forward is the identity clone.
    return _grl_pallas_identity(x)


def _grl_fwd(x, lambda_):
    # lambda_ is a traced runtime value (residual), NOT a static nondiff arg:
    # CTKD's cosine schedule changes it every step and must not recompile.
    return _grl_pallas_identity(x), lambda_


def _grl_bwd(lambda_, g):
    # PyTorch: dx = lambda_ * grads; lambda_ itself gets no gradient (None in
    # PyTorch → explicit zero cotangent here).  Plain jnp so XLA fuses it.
    return (lambda_ * g, jnp.zeros_like(lambda_))


gradient_reversal.defvjp(_grl_fwd, _grl_bwd)


def global_t_forward(global_T, fake_input1, fake_input2, lambda_):
    """Forward of Global_T: gradient-reversal identity of the global_T param.

    fake_input1 / fake_input2 mirror the PyTorch signature and are unused in
    both forward and backward (they receive no gradient in the PyTorch module).
    """
    del fake_input1, fake_input2  # unused by the module
    lambda_ = jnp.asarray(lambda_, dtype=global_T.dtype)
    return gradient_reversal(global_T, lambda_)


if __name__ == "__main__":
    key = jax.random.PRNGKey(0)
    k1, k2 = jax.random.split(key)

    # Deterministic parameter init, matching nn.Parameter(torch.ones(1)).
    global_T = jnp.ones((1,), dtype=jnp.float32)

    # Dummy inputs mirroring the PyTorch forward signature (small shapes).
    fake_input1 = jax.random.normal(k1, (2, 4), dtype=jnp.float32)
    fake_input2 = jax.random.normal(k2, (2, 4), dtype=jnp.float32)

    # Forward: identity clone of the parameter (eager).
    out = global_t_forward(global_T, fake_input1, fake_input2, 0.5)
    out = jax.block_until_ready(out)
    assert out.shape == (1,)
    assert out.dtype == jnp.float32
    assert bool(jnp.allclose(out, global_T))

    # lambda_ is a runtime operand: one jitted graph serves the whole cosine
    # schedule (different lambda values, no retrace per step).
    fwd_jit = jax.jit(
        lambda t, lam: global_t_forward(t, fake_input1, fake_input2, lam)
    )
    out_a = jax.block_until_ready(fwd_jit(global_T, jnp.float32(0.5)))
    out_b = jax.block_until_ready(fwd_jit(global_T, jnp.float32(0.9)))
    assert bool(jnp.allclose(out_a, global_T))
    assert bool(jnp.allclose(out_b, global_T))

    # Backward: dx = lambda_ * grads (gradient-reversal semantics per CTKD;
    # any sign convention is carried inside lambda_ itself).
    grad_fn = jax.jit(
        jax.grad(
            lambda t, lam: jnp.sum(
                global_t_forward(t, fake_input1, fake_input2, lam)
            )
        )
    )
    grad_T_a = jax.block_until_ready(grad_fn(global_T, jnp.float32(0.5)))
    grad_T_b = jax.block_until_ready(grad_fn(global_T, jnp.float32(-0.25)))
    assert bool(jnp.allclose(grad_T_a, jnp.full((1,), 0.5, jnp.float32)))
    assert bool(jnp.allclose(grad_T_b, jnp.full((1,), -0.25, jnp.float32)))

    print("KERNEL_OK")
</pallas_src>

<mosaic_0001>
module attributes {stable_mosaic.version = 11 : i64} {
  func.func @_grl_forward_kernel(%arg0: memref<1xf32, #tpu.memory_space<smem>>, %arg1: memref<1xf32, #tpu.memory_space<smem>>) attributes {dimension_semantics = [], scalar_prefetch = 0 : i64, scratch_operands = 0 : i64, tpu.core_type = #tpu.core_type<tc>} {
    %c0 = arith.constant 0 : index
    %0 = memref.load %arg0[%c0] : memref<1xf32, #tpu.memory_space<smem>>
    %c0_0 = arith.constant 0 : index
    %1 = memref.load %arg1[%c0_0] : memref<1xf32, #tpu.memory_space<smem>>
    memref.store %0, %arg1[%c0_0] : memref<1xf32, #tpu.memory_space<smem>>
    return
  }
}

</mosaic_0001>

<llo_original>
// kernel: tpu_custom_call.1
$region0: #{tpu_custom_call.1}
  #allocation0 [shape = 'u32[]', space=smem, size = 0x4, offset = 0x4, fixed_abs, tag = 'smem constant byte address 0x4 - core index']
  #allocation1 [shape = 'u32[144,128]{1,0:T(1,128)}', space=vmem, size = 0x12000, scoped, tag = 'internal scratch']
  #allocation2 [shape = 'f32[1]{0:T(128)S(6)}', space=smem, size = 0x200, scoped, tag = 'scoped memory for tpu_custom_call.1']
  %s0 = inlined_call_operand.<no memory space> [shape: f32[1], index: 0, kind: input, shape index: {}, may-alias: {0,1}]
  %s1 = inlined_call_operand.hbm [shape: f32[1], index: 1, kind: output, shape index: {}, may-alias: {0,1}]
  %s2 = sld [smem:[#allocation0]]
  $region14: #{tpu_custom_call.1} parent=0
    _
  %s4 = ssub.s32 1, %s2
  %s5 = scalar_select 0, %s4, %s2
  %6 = sst [smem:[#allocation2]] %s0
  $region1: #{tpu_custom_call.1} parent=0
    #allocation3 [shape = 'u8[512]{0}', space=smem, size = 0x200, scoped, tag = 'output window, operand 0, single buffered']
    #allocation4 [shape = 's32[1]{0}', space=sflag, size = 0x4, scoped, tag = 'scoped memory for tpu_custom_call.1']
    %7 = vsyncpa [#allocation4], 0
    // Predicated region
    $region2: #{tpu_custom_call.1} parent=1 // pred_check
      _
    $region3: #{tpu_custom_call.1} parent=1 // pred_check_branch
      %9 = sbr.rel (0) target = $region5
    $region4: #{tpu_custom_call.1} parent=1 // pred_region
      _
    $region5: #{tpu_custom_call.1} parent=1 // pred_fallthru
      _
    %s10 = sld [smem:[#allocation2]]
    %s11 = scalar_lea.smem [#allocation3], 0
    %12 = sst [smem:[%s11]] %s10
    // Predicated region
    $region6: #{tpu_custom_call.1} parent=1 // pred_check
      _
    $region7: #{tpu_custom_call.1} parent=1 // pred_check_branch
      %14 = sbr.rel (0) target = $region9
    $region8: #{tpu_custom_call.1} parent=1 // pred_region
      %s16 = ssub.s32 16, 16
      %17 = vsyncadd [#allocation4], %s16
      %20 = dma.smem_to_hbm [#allocation3], 16, %s1, [#allocation4]
    $region9: #{tpu_custom_call.1} parent=1 // pred_fallthru
      _
    // Predicated region
    $region10: #{tpu_custom_call.1} parent=1 // pred_check
      _
    $region11: #{tpu_custom_call.1} parent=1 // pred_check_branch
      %22 = sbr.rel (0) target = $region13
    $region12: #{tpu_custom_call.1} parent=1 // pred_region
      %23 = dma.done [#allocation4], 16
    $region13: #{tpu_custom_call.1} parent=1 // pred_fallthru
      _
    %24 = sfence
    %25 = vsyncpa [#allocation4], 1

</llo_original>
